<compile_context>
chip_gen: v6e
topology: v6e:2x2x1
jax: 0.10.0
libtpu: 0.0.40
codegen_flags: <defaults>
</compile_context>

<pallas_src>
import jax
import jax.numpy as jnp
from jax.experimental import pallas as pl
from jax.experimental.pallas import tpu as pltpu


def _round_up(x, m):
    return ((x + m - 1) // m) * m


def _ortho_output_kernel(eps_ref, h_ref, res_ref, w_ref, b_ref, o_ref):
    """One row-tile of the OrthoViTOutput forward.

    eps_ref : SMEM (1,)   f32   residual_eps buffer
    h_ref   : VMEM (tm, I)      intermediate activations
    res_ref : VMEM (tm, H)      residual stream 'x'
    w_ref   : VMEM (I, H)       dense weight (transposed vs. PyTorch)
    b_ref   : VMEM (1, H)  f32  dense bias (pre-cast to f32 in the wrapper)
    o_ref   : VMEM (tm, H)      output
    """
    # Dense: MXU matmul with f32 accumulation + bias.
    f_x = jnp.dot(h_ref[...], w_ref[...], preferred_element_type=jnp.float32)
    f_x = f_x + b_ref[...]

    # TODO(synk): nn.Dropout is identity in eval mode; training-mode dropout
    # (pltpu.prng_random_bits mask) is not implemented here.

    # Orthogonal residual connect (per-token reduction over the hidden dim).
    x = res_ref[...].astype(jnp.float32)
    dot = jnp.sum(f_x * x, axis=-1, keepdims=True)
    nrm_sq = jnp.sum(x * x, axis=-1, keepdims=True)
    inv = pl.reciprocal(nrm_sq + eps_ref[0], approx=True)   # EUP slot, ~free
    o_ref[...] = (x + f_x - (dot * inv) * x).astype(o_ref.dtype)


def ortho_vit_output(hidden_states, residual_input, weight_t, bias, residual_eps,
                     *, tm=256, matmul_dtype=None):
    """hidden_states: [B, S, I], residual_input: [B, S, H],
    weight_t: [I, H] (PyTorch Linear weight transposed), bias: [H],
    residual_eps: python float / 0-d array.

    matmul_dtype: optionally cast the matmul operands (activations + weight) to
    a narrower dtype (e.g. jnp.bfloat16) for full-rate MXU throughput and
    halved HBM traffic; accumulation stays in f32 either way.
    """
    B, S, I = hidden_states.shape
    H = weight_t.shape[1]
    out_dtype = hidden_states.dtype
    M = B * S

    h2 = hidden_states.reshape(M, I)
    r2 = residual_input.reshape(M, H)
    w = weight_t
    if matmul_dtype is not None:
        h2 = h2.astype(matmul_dtype)
        w = w.astype(matmul_dtype)
    b2 = bias.astype(jnp.float32).reshape(1, H)          # cast once, not per step
    eps_arr = jnp.asarray([residual_eps], dtype=jnp.float32)

    # Row tile: large enough to fill the MXU, clamped to the (padded) row count,
    # and a multiple of the sublane packing for the activation dtype (8 for
    # 32-bit, 16 for 16-bit).
    sub = 16 if jnp.dtype(h2.dtype).itemsize == 2 else 8
    tm_eff = min(int(tm), _round_up(M, sub))
    tm_eff = max(sub, (tm_eff // sub) * sub)
    Mp = _round_up(M, tm_eff)
    if Mp != M:
        # Zero-pad the ragged final tile (x = 0 rows are harmless: nrm_sq = 0,
        # dot = 0, and the padded outputs are sliced off below).
        h2 = jnp.pad(h2, ((0, Mp - M), (0, 0)))
        r2 = jnp.pad(r2, ((0, Mp - M), (0, 0)))

    # NOTE: keep H a multiple of 128 in deployed configs so output stores stay
    # lane-dense; only the toy test shape (H=32) hits masked stores.

    # Scoped-VMEM budget for the chosen tiles (>= compiler default, capped at
    # 64 MiB so the same configuration also fits one v7x TensorCore).
    itm = lambda a: jnp.dtype(a.dtype).itemsize
    need = (2 * tm_eff * I * itm(h2)                     # double-buffered h blocks
            + 2 * tm_eff * H * itm(r2)                   # double-buffered residual
            + 2 * tm_eff * H * jnp.dtype(out_dtype).itemsize
            + 2 * (I * H * itm(w) + H * 4)               # weight + bias buffers
            + 6 * tm_eff * H * 4)                        # f32 epilogue temporaries
    vmem_limit = max(32 * 1024 * 1024,
                     min(int(need * 1.25) + (2 << 20), 64 * 1024 * 1024))

    cost = pl.CostEstimate(
        flops=2 * Mp * I * H + 8 * Mp * H,
        transcendentals=Mp,
        bytes_accessed=(h2.size * itm(h2) + r2.size * itm(r2)
                        + w.size * itm(w) + b2.size * 4
                        + Mp * H * jnp.dtype(out_dtype).itemsize))

    def _run(single_buffer_invariants):
        # Weight / bias block indices never change across the grid; single-
        # buffering them reclaims a full weight-sized VMEM allocation.
        inv_kw = ({"pipeline_mode": pl.Buffered(1)}
                  if single_buffer_invariants else {})
        grid_spec = pltpu.PrefetchScalarGridSpec(
            num_scalar_prefetch=0,
            grid=(Mp // tm_eff,),
            in_specs=[
                pl.BlockSpec(memory_space=pltpu.MemorySpace.SMEM),    # eps
                pl.BlockSpec((tm_eff, I), lambda i: (i, 0)),          # h
                pl.BlockSpec((tm_eff, H), lambda i: (i, 0)),          # residual x
                pl.BlockSpec((I, H), lambda i: (0, 0), **inv_kw),     # weight
                pl.BlockSpec((1, H), lambda i: (0, 0), **inv_kw),     # bias
            ],
            out_specs=pl.BlockSpec((tm_eff, H), lambda i: (i, 0)),
        )
        return pl.pallas_call(
            _ortho_output_kernel,
            out_shape=jax.ShapeDtypeStruct((Mp, H), out_dtype),
            grid_spec=grid_spec,
            compiler_params=pltpu.CompilerParams(
                dimension_semantics=("parallel",),
                vmem_limit_bytes=vmem_limit),
            cost_estimate=cost,
        )(eps_arr, h2, r2, w, b2)

    try:
        out = _run(True)
    except Exception:
        # Fallback if this jax/Mosaic build rejects pl.Buffered(1) on a
        # pallas_call BlockSpec: use default double-buffering.
        out = _run(False)

    return out[:M].reshape(B, S, H)


def _reference(hidden_states, residual_input, weight_t, bias, eps):
    f_x = jnp.einsum("bsi,ih->bsh", hidden_states, weight_t) + bias
    x = residual_input
    dot = jnp.sum(f_x * x, axis=-1, keepdims=True)
    nrm = jnp.sum(x * x, axis=-1, keepdims=True)
    return x + (f_x - dot / (nrm + eps) * x)


def _make_case(key, batch, seq, hidden_size, intermediate_size):
    k_h, k_r, k_w, k_b = jax.random.split(key, 4)
    h = jax.random.normal(k_h, (batch, seq, intermediate_size), jnp.float32)
    r = jax.random.normal(k_r, (batch, seq, hidden_size), jnp.float32)
    w_t = (jax.random.normal(k_w, (intermediate_size, hidden_size), jnp.float32)
           * (1.0 / jnp.sqrt(intermediate_size)))
    b = jax.random.normal(k_b, (hidden_size,), jnp.float32) * 0.01
    return h, r, w_t, b


if __name__ == "__main__":
    residual_eps = 1e-6
    k1, k2 = jax.random.split(jax.random.PRNGKey(0))

    # Case 1: toy config matching the module (hidden=32, intermediate=4*hidden).
    h, r, w_t, b = _make_case(k1, 2, 8, 32, 64)
    out = jax.block_until_ready(ortho_vit_output(h, r, w_t, b, residual_eps))
    ref = _reference(h, r, w_t, b, residual_eps)
    assert out.shape == r.shape
    assert jnp.allclose(out, ref, atol=2e-3, rtol=2e-3)

    # Case 2: lane-dense hidden dim + ragged token count (exercises the
    # row-padding path: M = 2*13 = 26 is not a multiple of the tile).
    h, r, w_t, b = _make_case(k2, 2, 13, 128, 256)
    out = jax.block_until_ready(ortho_vit_output(h, r, w_t, b, residual_eps))
    ref = _reference(h, r, w_t, b, residual_eps)
    assert out.shape == r.shape
    assert jnp.allclose(out, ref, atol=2e-3, rtol=2e-3)

    print("KERNEL_OK")
</pallas_src>

<mosaic_0001>
module attributes {stable_mosaic.version = 11 : i64} {
  func.func @_ortho_output_kernel(%arg0: i32, %arg1: memref<1xf32, #tpu.memory_space<smem>>, %arg2: memref<16x64xf32, #tpu.memory_space<vmem>>, %arg3: memref<16x32xf32, #tpu.memory_space<vmem>>, %arg4: memref<64x32xf32, #tpu.memory_space<vmem>>, %arg5: memref<1x32xf32, #tpu.memory_space<vmem>>, %arg6: memref<16x32xf32, #tpu.memory_space<vmem>>) attributes {dimension_semantics = [#tpu.dimension_semantics<parallel>], iteration_bounds = array<i64: 1>, scalar_prefetch = 0 : i64, scratch_operands = 0 : i64, tpu.core_type = #tpu.core_type<tc>, window_params = [{transform_indices = @transform_0, window_bounds = array<i64: 1>}, {transform_indices = @transform_1, window_bounds = array<i64: 16, 64>}, {transform_indices = @transform_2, window_bounds = array<i64: 16, 32>}, {pipeline_mode = #tpu.pipeline_mode<synchronous>, transform_indices = @transform_3, window_bounds = array<i64: 64, 32>}, {pipeline_mode = #tpu.pipeline_mode<synchronous>, transform_indices = @transform_4, window_bounds = array<i64: 1, 32>}, {transform_indices = @transform_5, window_bounds = array<i64: 16, 32>}]} {
    %c0 = arith.constant 0 : index
    %c0_0 = arith.constant 0 : index
    %0 = vector.load %arg2[%c0, %c0_0] : memref<16x64xf32, #tpu.memory_space<vmem>>, vector<16x64xf32>
    %c0_1 = arith.constant 0 : index
    %c0_2 = arith.constant 0 : index
    %1 = vector.load %arg4[%c0_1, %c0_2] : memref<64x32xf32, #tpu.memory_space<vmem>>, vector<64x32xf32>
    %cst = arith.constant dense<0.000000e+00> : vector<16x32xf32>
    %2 = tpu.matmul %0, %1, %cst {dimension_numbers = #tpu.dot_dimension_numbers<[1], [0], [0], [1], [0, 0, 1, 1], [], []>} : vector<16x64xf32>, vector<64x32xf32>, vector<16x32xf32> -> vector<16x32xf32>
    %c0_3 = arith.constant 0 : index
    %c0_4 = arith.constant 0 : index
    %3 = vector.load %arg5[%c0_3, %c0_4] : memref<1x32xf32, #tpu.memory_space<vmem>>, vector<1x32xf32>
    %4 = vector.broadcast %3 : vector<1x32xf32> to vector<16x32xf32>
    %5 = arith.addf %2, %4 : vector<16x32xf32>
    %c0_5 = arith.constant 0 : index
    %c0_6 = arith.constant 0 : index
    %6 = vector.load %arg3[%c0_5, %c0_6] : memref<16x32xf32, #tpu.memory_space<vmem>>, vector<16x32xf32>
    %7 = arith.mulf %5, %6 : vector<16x32xf32>
    %cst_7 = arith.constant dense<0.000000e+00> : vector<16xf32>
    %8 = vector.multi_reduction <add>, %7, %cst_7 [1] : vector<16x32xf32> to vector<16xf32>
    %9 = vector.shape_cast %8 : vector<16xf32> to vector<16x1xf32>
    %10 = arith.mulf %6, %6 : vector<16x32xf32>
    %cst_8 = arith.constant dense<0.000000e+00> : vector<16xf32>
    %11 = vector.multi_reduction <add>, %10, %cst_8 [1] : vector<16x32xf32> to vector<16xf32>
    %12 = vector.shape_cast %11 : vector<16xf32> to vector<16x1xf32>
    %c0_9 = arith.constant 0 : index
    %13 = memref.load %arg1[%c0_9] : memref<1xf32, #tpu.memory_space<smem>>
    %14 = vector.broadcast %13 : f32 to vector<16x1xf32>
    %15 = arith.addf %12, %14 : vector<16x1xf32>
    %16 = tpu.reciprocal %15 {approx = true} : vector<16x1xf32> -> vector<16x1xf32>
    %17 = arith.addf %6, %5 : vector<16x32xf32>
    %18 = arith.mulf %9, %16 : vector<16x1xf32>
    %19 = vector.broadcast %18 : vector<16x1xf32> to vector<16x32xf32>
    %20 = arith.mulf %19, %6 : vector<16x32xf32>
    %21 = arith.subf %17, %20 : vector<16x32xf32>
    %c0_10 = arith.constant 0 : index
    %c0_11 = arith.constant 0 : index
    %22 = vector.load %arg6[%c0_10, %c0_11] : memref<16x32xf32, #tpu.memory_space<vmem>>, vector<16x32xf32>
    tpu.vector_store %arg6[%c0_10, %c0_11], %21 {strides = array<i32>} : memref<16x32xf32, #tpu.memory_space<vmem>>, vector<16x32xf32>,
    return
  }
  func.func @transform_0(%arg0: i32) -> i32 {
    %c0_i32 = arith.constant 0 : i32
    %c0_i32_0 = arith.constant 0 : i32
    return %c0_i32 : i32
  }
  func.func @transform_1(%arg0: i32) -> (i32, i32) {
    %c0_i32 = arith.constant 0 : i32
    %c0_i32_0 = arith.constant 0 : i32
    return %arg0, %c0_i32 : i32, i32
  }
  func.func @transform_2(%arg0: i32) -> (i32, i32) {
    %c0_i32 = arith.constant 0 : i32
    %c0_i32_0 = arith.constant 0 : i32
    return %arg0, %c0_i32 : i32, i32
  }
  func.func @transform_3(%arg0: i32) -> (i32, i32) {
    %c0_i32 = arith.constant 0 : i32
    %c0_i32_0 = arith.constant 0 : i32
    %c0_i32_1 = arith.constant 0 : i32
    return %c0_i32, %c0_i32_0 : i32, i32
  }
  func.func @transform_4(%arg0: i32) -> (i32, i32) {
    %c0_i32 = arith.constant 0 : i32
    %c0_i32_0 = arith.constant 0 : i32
    %c0_i32_1 = arith.constant 0 : i32
    return %c0_i32, %c0_i32_0 : i32, i32
  }
  func.func @transform_5(%arg0: i32) -> (i32, i32) {
    %c0_i32 = arith.constant 0 : i32
    %c0_i32_0 = arith.constant 0 : i32
    return %arg0, %c0_i32 : i32, i32
  }
}

module attributes {stable_mosaic.version = 11 : i64} {
  func.func @_ortho_output_kernel(%arg0: i32, %arg1: memref<1xf32, #tpu.memory_space<smem>>, %arg2: memref<16x64xf32, #tpu.memory_space<vmem>>, %arg3: memref<16x32xf32, #tpu.memory_space<vmem>>, %arg4: memref<64x32xf32, #tpu.memory_space<vmem>>, %arg5: memref<1x32xf32, #tpu.memory_space<vmem>>, %arg6: memref<16x32xf32, #tpu.memory_space<vmem>>) attributes {dimension_semantics = [#tpu.dimension_semantics<parallel>], iteration_bounds = array<i64: 1>, scalar_prefetch = 0 : i64, scratch_operands = 0 : i64, tpu.core_type = #tpu.core_type<tc>, window_params = [{transform_indices = @transform_0, window_bounds = array<i64: 1>}, {transform_indices = @transform_1, window_bounds = array<i64: 16, 64>}, {transform_indices = @transform_2, window_bounds = array<i64: 16, 32>}, {pipeline_mode = #tpu.pipeline_mode<synchronous>, transform_indices = @transform_3, window_bounds = array<i64: 64, 32>}, {pipeline_mode = #tpu.pipeline_mode<synchronous>, transform_indices = @transform_4, window_bounds = array<i64: 1, 32>}, {transform_indices = @transform_5, window_bounds = array<i64: 16, 32>}]} {
    %c0 = arith.constant 0 : index
    %c0_0 = arith.constant 0 : index
    %0 = vector.load %arg2[%c0, %c0_0] : memref<16x64xf32, #tpu.memory_space<vmem>>, vector<16x64xf32>
    %c0_1 = arith.constant 0 : index
    %c0_2 = arith.constant 0 : index
    %1 = vector.load %arg4[%c0_1, %c0_2] : memref<64x32xf32, #tpu.memory_space<vmem>>, vector<64x32xf32>
    %cst = arith.constant dense<0.000000e+00> : vector<16x32xf32>
    %2 = tpu.matmul %0, %1, %cst {dimension_numbers = #tpu.dot_dimension_numbers<[1], [0], [0], [1], [0, 0, 1, 1], [], []>} : vector<16x64xf32>, vector<64x32xf32>, vector<16x32xf32> -> vector<16x32xf32>
    %c0_3 = arith.constant 0 : index
    %c0_4 = arith.constant 0 : index
    %3 = vector.load %arg5[%c0_3, %c0_4] : memref<1x32xf32, #tpu.memory_space<vmem>>, vector<1x32xf32>
    %4 = vector.broadcast %3 : vector<1x32xf32> to vector<16x32xf32>
    %5 = arith.addf %2, %4 : vector<16x32xf32>
    %c0_5 = arith.constant 0 : index
    %c0_6 = arith.constant 0 : index
    %6 = vector.load %arg3[%c0_5, %c0_6] : memref<16x32xf32, #tpu.memory_space<vmem>>, vector<16x32xf32>
    %7 = arith.mulf %5, %6 : vector<16x32xf32>
    %cst_7 = arith.constant dense<0.000000e+00> : vector<16xf32>
    %8 = vector.multi_reduction <add>, %7, %cst_7 [1] : vector<16x32xf32> to vector<16xf32>
    %9 = vector.shape_cast %8 : vector<16xf32> to vector<16x1xf32>
    %10 = arith.mulf %6, %6 : vector<16x32xf32>
    %cst_8 = arith.constant dense<0.000000e+00> : vector<16xf32>
    %11 = vector.multi_reduction <add>, %10, %cst_8 [1] : vector<16x32xf32> to vector<16xf32>
    %12 = vector.shape_cast %11 : vector<16xf32> to vector<16x1xf32>
    %c0_9 = arith.constant 0 : index
    %13 = memref.load %arg1[%c0_9] : memref<1xf32, #tpu.memory_space<smem>>
    %14 = vector.broadcast %13 : f32 to vector<16x1xf32>
    %15 = arith.addf %12, %14 : vector<16x1xf32>
    %16 = tpu.reciprocal %15 {approx = true} : vector<16x1xf32> -> vector<16x1xf32>
    %17 = arith.addf %6, %5 : vector<16x32xf32>
    %18 = arith.mulf %9, %16 : vector<16x1xf32>
    %19 = vector.broadcast %18 : vector<16x1xf32> to vector<16x32xf32>
    %20 = arith.mulf %19, %6 : vector<16x32xf32>
    %21 = arith.subf %17, %20 : vector<16x32xf32>
    %c0_10 = arith.constant 0 : index
    %c0_11 = arith.constant 0 : index
    %22 = vector.load %arg6[%c0_10, %c0_11] : memref<16x32xf32, #tpu.memory_space<vmem>>, vector<16x32xf32>
    tpu.vector_store %arg6[%c0_10, %c0_11], %21 {strides = array<i32>} : memref<16x32xf32, #tpu.memory_space<vmem>>, vector<16x32xf32>,
    return
  }
  func.func @transform_0(%arg0: i32) -> i32 {
    %c0_i32 = arith.constant 0 : i32
    %c0_i32_0 = arith.constant 0 : i32
    return %c0_i32 : i32
  }
  func.func @transform_1(%arg0: i32) -> (i32, i32) {
    %c0_i32 = arith.constant 0 : i32
    %c0_i32_0 = arith.constant 0 : i32
    return %arg0, %c0_i32 : i32, i32
  }
  func.func @transform_2(%arg0: i32) -> (i32, i32) {
    %c0_i32 = arith.constant 0 : i32
    %c0_i32_0 = arith.constant 0 : i32
    return %arg0, %c0_i32 : i32, i32
  }
  func.func @transform_3(%arg0: i32) -> (i32, i32) {
    %c0_i32 = arith.constant 0 : i32
    %c0_i32_0 = arith.constant 0 : i32
    %c0_i32_1 = arith.constant 0 : i32
    return %c0_i32, %c0_i32_0 : i32, i32
  }
  func.func @transform_4(%arg0: i32) -> (i32, i32) {
    %c0_i32 = arith.constant 0 : i32
    %c0_i32_0 = arith.constant 0 : i32
    %c0_i32_1 = arith.constant 0 : i32
    return %c0_i32, %c0_i32_0 : i32, i32
  }
  func.func @transform_5(%arg0: i32) -> (i32, i32) {
    %c0_i32 = arith.constant 0 : i32
    %c0_i32_0 = arith.constant 0 : i32
    return %arg0, %c0_i32 : i32, i32
  }
}

</mosaic_0001>

<llo_original>
// kernel: tpu_custom_call.1
$region0: #{tpu_custom_call.1}
  #allocation0 [shape = 'u32[]', space=smem, size = 0x4, offset = 0x4, fixed_abs, tag = 'smem constant byte address 0x4 - core index']
  #allocation1 [shape = 'u32[144,128]{1,0:T(1,128)}', space=vmem, size = 0x12000, scoped, tag = 'internal scratch']
  #allocation2 [shape = 'f32[1]{0:T(128)S(6)}', space=smem, size = 0x200, scoped, tag = 'scoped memory for tpu_custom_call.1']
  %s0 = inlined_call_operand.<no memory space> [shape: f32[1], index: 0, kind: input, shape index: {}]
  %s1 = inlined_call_operand.vmem [shape: f32[16,64], index: 1, kind: input, shape index: {}]
  %s2 = inlined_call_operand.vmem [shape: f32[16,32], index: 2, kind: input, shape index: {}]
  %s3 = inlined_call_operand.vmem [shape: f32[64,32], index: 3, kind: input, shape index: {}]
  %s4 = inlined_call_operand.vmem [shape: f32[1,32], index: 4, kind: input, shape index: {}]
  %s5 = inlined_call_operand.hbm [shape: f32[16,32], index: 5, kind: output, shape index: {}]
  %s6 = sld [smem:[#allocation0]]
  $region30: #{tpu_custom_call.1} parent=0
    _
  %s8 = ssub.s32 1, %s6
  %s9 = scalar_select 0, %s8, %s6
  %10 = sst [smem:[#allocation2]] %s0
  $region1: #{tpu_custom_call.1} parent=0
    #allocation3 [shape = 'u8[8192]{0}', space=vmem, size = 0x2000, scoped, tag = 'output window, operand 0, single buffered']
    #allocation4 [shape = 's32[1]{0}', space=sflag, size = 0x4, scoped, tag = 'scoped memory for tpu_custom_call.1']
    %11 = vsyncpa [#allocation4], 0
    // Predicated region
    $region2: #{tpu_custom_call.1} parent=1 // pred_check
      _
    $region3: #{tpu_custom_call.1} parent=1 // pred_check_branch
      %13 = sbr.rel (0) target = $region5
    $region4: #{tpu_custom_call.1} parent=1 // pred_region
      _
    $region5: #{tpu_custom_call.1} parent=1 // pred_fallthru
      _
    // Predicated region
    $region6: #{tpu_custom_call.1} parent=1 // pred_check
      _
    $region7: #{tpu_custom_call.1} parent=1 // pred_check_branch
      %15 = sbr.rel (0) target = $region9
    $region8: #{tpu_custom_call.1} parent=1 // pred_region
      _
    $region9: #{tpu_custom_call.1} parent=1 // pred_fallthru
      _
    // Predicated region
    $region10: #{tpu_custom_call.1} parent=1 // pred_check
      _
    $region11: #{tpu_custom_call.1} parent=1 // pred_check_branch
      %17 = sbr.rel (0) target = $region13
    $region12: #{tpu_custom_call.1} parent=1 // pred_region
      _
    $region13: #{tpu_custom_call.1} parent=1 // pred_fallthru
      _
    // Predicated region
    $region14: #{tpu_custom_call.1} parent=1 // pred_check
      _
    $region15: #{tpu_custom_call.1} parent=1 // pred_check_branch
      %19 = sbr.rel (0) target = $region17
    $region16: #{tpu_custom_call.1} parent=1 // pred_region
      _
    $region17: #{tpu_custom_call.1} parent=1 // pred_fallthru
      _
    // Predicated region
    $region18: #{tpu_custom_call.1} parent=1 // pred_check
      _
    $region19: #{tpu_custom_call.1} parent=1 // pred_check_branch
      %21 = sbr.rel (0) target = $region21
    $region20: #{tpu_custom_call.1} parent=1 // pred_region
      _
    $region21: #{tpu_custom_call.1} parent=1 // pred_fallthru
      _
    %v22 = vld [vmem:[%s1] sm:$0xff]
    %v23 = vld [vmem:[%s1 + $0x8] sm:$0xff]
    %v24 = vld [vmem:[%s3] sm:$0xff]
    %v25 = vld [vmem:[%s3 + $0x8] sm:$0xff]
    %v26 = vld [vmem:[%s3 + $0x10] sm:$0xff]
    %v27 = vld [vmem:[%s3 + $0x18] sm:$0xff]
    %v28 = vld [vmem:[%s3 + $0x20] sm:$0xff]
    %v29 = vld [vmem:[%s3 + $0x28] sm:$0xff]
    %v30 = vld [vmem:[%s3 + $0x30] sm:$0xff]
    %v31 = vld [vmem:[%s3 + $0x38] sm:$0xff]
    %v32 = vld [vmem:[%s4] sm:$0x1]
    %v34 = vlaneseq
    %v35 = vshrl.u32 %v34, 7
    %v36 = vsub.s32 0, %v35
    %v37 = vrot.slane %v32, %v36
    %vm39 = vcmask 523264
    %v41 = vsel %vm39, %v22, 0
    %v44 = vsel %vm39, %v23, 0
    %46 = vmatprep.subr.mxu0 0.0
    %47 = vmatpush1.msra.mxu0 0.0
    %48 = vmatprep.subr.mxu0 0.0
    %49 = vmatpush1.msra.mxu0 0.0
    %50 = vmatprep.subr.mxu0 0.0
    %51 = vmatpush1.msra.mxu0 0.0
    %52 = vmatprep.subr.mxu0 0.0
    %53 = vmatpush1.msra.mxu0 0.0
    %54 = vmatprep.subr.mxu0 0.0
    %55 = vmatpush1.msra.mxu0 0.0
    %56 = vmatprep.subr.mxu0 0.0
    %57 = vmatpush1.msra.mxu0 0.0
    %58 = vmatprep.subr.mxu0 0.0
    %59 = vmatpush1.msra.mxu0 0.0
    %60 = vmatprep.subr.mxu0 0.0
    %61 = vmatpush1.msra.mxu0 0.0
    %62 = vmatprep.subr.mxu0 0.0
    %63 = vmatpush1.msra.mxu0 %v31
    %64 = vmatprep.subr.mxu0 0.0
    %65 = vmatpush1.msra.mxu0 %v30
    %66 = vmatprep.subr.mxu0 0.0
    %67 = vmatpush1.msra.mxu0 %v29
    %68 = vmatprep.subr.mxu0 0.0
    %69 = vmatpush1.msra.mxu0 %v28
    %70 = vmatprep.subr.mxu0 0.0
    %71 = vmatpush1.msra.mxu0 %v27
    %72 = vmatprep.subr.mxu0 0.0
    %73 = vmatpush1.msra.mxu0 %v26
    %74 = vmatprep.subr.mxu0 0.0
    %75 = vmatpush1.msra.mxu0 %v25
    %76 = vmatprep.subr.mxu0 0.0
    %77 = vmatpush1.msra.mxu0 %v24
    %78 = vmatprep.subr.mxu0 0.0
    %79 = vmatpush2.msra.mxu0 0.0
    %80 = vmatprep.subr.mxu0 0.0
    %81 = vmatpush2.msra.mxu0 0.0
    %82 = vmatprep.subr.mxu0 0.0
    %83 = vmatpush2.msra.mxu0 0.0
    %84 = vmatprep.subr.mxu0 0.0
    %85 = vmatpush2.msra.mxu0 0.0
    %86 = vmatprep.subr.mxu0 0.0
    %87 = vmatpush2.msra.mxu0 0.0
    %88 = vmatprep.subr.mxu0 0.0
    %89 = vmatpush2.msra.mxu0 0.0
    %90 = vmatprep.subr.mxu0 0.0
    %91 = vmatpush2.msra.mxu0 0.0
    %92 = vmatprep.subr.mxu0 0.0
    %93 = vmatpush2.msra.mxu0 0.0
    %94 = vmatprep.subr.mxu0 0.0
    %95 = vmatpush2.msra.mxu0 0.0
    %96 = vmatprep.subr.mxu0 0.0
    %97 = vmatpush2.msra.mxu0 0.0
    %98 = vmatprep.subr.mxu0 0.0
    %99 = vmatpush2.msra.mxu0 0.0
    %100 = vmatprep.subr.mxu0 0.0
    %101 = vmatpush2.msra.mxu0 0.0
    %102 = vmatprep.subr.mxu0 0.0
    %103 = vmatpush2.msra.mxu0 0.0
    %104 = vmatprep.subr.mxu0 0.0
    %105 = vmatpush2.msra.mxu0 0.0
    %106 = vmatprep.subr.mxu0 0.0
    %107 = vmatpush2.msra.mxu0 0.0
    %108 = vmatprep.subr.mxu0 0.0
    %109 = vmatpush2.msra.mxu0 0.0
    %110 = vmatprep.mubr.f32.mxu0 0.0
    %111 = vmatmul.mubr.f32.gmra.mxu0 %v41
    %v112 = vpop.f32.mrf.mxu0
    %v113 = vadd.f32 %v37, %v112
    %v114 = vpop.f32.mrf.mxu0
    %115 = vmatprep.mubr.f32.mxu0 0.0
    %116 = vmatmul.mubr.f32.gmra.mxu0 %v44
    %v117 = vpop.f32.mrf.mxu0
    %v118 = vadd.f32 %v37, %v117
    %v119 = vpop.f32.mrf.mxu0
    %120 = vdwg.mxu0
    %v121 = vld [vmem:[%s2] sm:$0xff]
    %v122 = vld [vmem:[%s2 + $0x8] sm:$0xff]
    %v123 = vmul.f32 %v113, %v121
    %v124 = vmul.f32 %v118, %v122
    %vm125 = vcmask 261120
    %v126 = vsel %vm125, %v123, 0.0
    %127 = vadd.xlane.f32.xlu0 %v126
    %v128 = vpop.xlane.xlu0 %127
    %v129 = vsel %vm125, %v124, 0.0
    %130 = vadd.xlane.f32.xlu0 %v129
    %v131 = vpop.xlane.xlu0 %130
    %v132 = vmul.f32 %v121, %v121
    %v133 = vmul.f32 %v122, %v122
    %v134 = vsel %vm125, %v132, 0.0
    %135 = vadd.xlane.f32.xlu0 %v134
    %v136 = vpop.xlane.xlu0 %135
    %v137 = vsel %vm125, %v133, 0.0
    %138 = vadd.xlane.f32.xlu0 %v137
    %v139 = vpop.xlane.xlu0 %138
    %s140 = sld [smem:[#allocation2]]
    %v141 = vstv %s140
    %v142 = vadd.f32 %v136, %v141
    %v143 = vadd.f32 %v139, %v141
    %v144 = vrcp.pop %v142
    %v145 = vrcp.pop %v143
    %v146 = vadd.f32 %v121, %v113
    %v147 = vadd.f32 %v122, %v118
    %v148 = vmul.f32 %v128, %v144
    %v149 = vmul.f32 %v131, %v145
    %v150 = vmul.f32 %v148, %v121
    %v151 = vmul.f32 %v149, %v122
    %v152 = vsub.f32 %v146, %v150
    %v153 = vsub.f32 %v147, %v151
    %154 = vst.msk [vmem:[#allocation3] sm:$0xff] %vm125, %v152
    %155 = vst.msk [vmem:[#allocation3 + $0x8] sm:$0xff] %vm125, %v153
    // Predicated region
    $region22: #{tpu_custom_call.1} parent=1 // pred_check
      _
    $region23: #{tpu_custom_call.1} parent=1 // pred_check_branch
      %157 = sbr.rel (0) target = $region25
    $region24: #{tpu_custom_call.1} parent=1 // pred_region
      %s159 = ssub.s32 256, 256
      %160 = vsyncadd [#allocation4], %s159
      %s161 = sshll.u32 [#allocation3], 4
      %s162 = int_to_ptr.vmem [resolvable:$true] %s161
      %167 = dma.vmem_to_hbm [thread:$0]  %s162, 256, %s5, [#allocation4], 128, 128, 8
    $region25: #{tpu_custom_call.1} parent=1 // pred_fallthru
      _
    // Predicated region
    $region26: #{tpu_custom_call.1} parent=1 // pred_check
      _
    $region27: #{tpu_custom_call.1} parent=1 // pred_check_branch
      %169 = sbr.rel (0) target = $region29
    $region28: #{tpu_custom_call.1} parent=1 // pred_region
      %170 = dma.done [#allocation4], 256
    $region29: #{tpu_custom_call.1} parent=1 // pred_fallthru
      _
    %171 = vsyncpa [#allocation4], 1

// kernel: tpu_custom_call.1
$region0: #{tpu_custom_call.1}
  #allocation0 [shape = 'u32[]', space=smem, size = 0x4, offset = 0x4, fixed_abs, tag = 'smem constant byte address 0x4 - core index']
  #allocation1 [shape = 'u32[144,128]{1,0:T(1,128)}', space=vmem, size = 0x12000, scoped, tag = 'internal scratch']
  #allocation2 [shape = 'f32[1]{0:T(128)S(6)}', space=smem, size = 0x200, scoped, tag = 'scoped memory for tpu_custom_call.1']
  %s0 = inlined_call_operand.<no memory space> [shape: f32[1], index: 0, kind: input, shape index: {}]
  %s1 = inlined_call_operand.vmem [shape: f32[16,64], index: 1, kind: input, shape index: {}]
  %s2 = inlined_call_operand.vmem [shape: f32[16,32], index: 2, kind: input, shape index: {}]
  %s3 = inlined_call_operand.vmem [shape: f32[64,32], index: 3, kind: input, shape index: {}]
  %s4 = inlined_call_operand.vmem [shape: f32[1,32], index: 4, kind: input, shape index: {}]
  %s5 = inlined_call_operand.hbm [shape: f32[16,32], index: 5, kind: output, shape index: {}]
  %s6 = sld [smem:[#allocation0]]
  $region30: #{tpu_custom_call.1} parent=0
    _
  %s8 = ssub.s32 1, %s6
  %s9 = scalar_select 0, %s8, %s6
  %10 = sst [smem:[#allocation2]] %s0
  $region1: #{tpu_custom_call.1} parent=0
    #allocation3 [shape = 'u8[8192]{0}', space=vmem, size = 0x2000, scoped, tag = 'output window, operand 0, single buffered']
    #allocation4 [shape = 's32[1]{0}', space=sflag, size = 0x4, scoped, tag = 'scoped memory for tpu_custom_call.1']
    %11 = vsyncpa [#allocation4], 0
    // Predicated region
    $region2: #{tpu_custom_call.1} parent=1 // pred_check
      _
    $region3: #{tpu_custom_call.1} parent=1 // pred_check_branch
      %13 = sbr.rel (0) target = $region5
    $region4: #{tpu_custom_call.1} parent=1 // pred_region
      _
    $region5: #{tpu_custom_call.1} parent=1 // pred_fallthru
      _
    // Predicated region
    $region6: #{tpu_custom_call.1} parent=1 // pred_check
      _
    $region7: #{tpu_custom_call.1} parent=1 // pred_check_branch
      %15 = sbr.rel (0) target = $region9
    $region8: #{tpu_custom_call.1} parent=1 // pred_region
      _
    $region9: #{tpu_custom_call.1} parent=1 // pred_fallthru
      _
    // Predicated region
    $region10: #{tpu_custom_call.1} parent=1 // pred_check
      _
    $region11: #{tpu_custom_call.1} parent=1 // pred_check_branch
      %17 = sbr.rel (0) target = $region13
    $region12: #{tpu_custom_call.1} parent=1 // pred_region
      _
    $region13: #{tpu_custom_call.1} parent=1 // pred_fallthru
      _
    // Predicated region
    $region14: #{tpu_custom_call.1} parent=1 // pred_check
      _
    $region15: #{tpu_custom_call.1} parent=1 // pred_check_branch
      %19 = sbr.rel (0) target = $region17
    $region16: #{tpu_custom_call.1} parent=1 // pred_region
      _
    $region17: #{tpu_custom_call.1} parent=1 // pred_fallthru
      _
    // Predicated region
    $region18: #{tpu_custom_call.1} parent=1 // pred_check
      _
    $region19: #{tpu_custom_call.1} parent=1 // pred_check_branch
      %21 = sbr.rel (0) target = $region21
    $region20: #{tpu_custom_call.1} parent=1 // pred_region
      _
    $region21: #{tpu_custom_call.1} parent=1 // pred_fallthru
      _
    %v22 = vld [vmem:[%s1] sm:$0xff]
    %v23 = vld [vmem:[%s1 + $0x8] sm:$0xff]
    %v24 = vld [vmem:[%s3] sm:$0xff]
    %v25 = vld [vmem:[%s3 + $0x8] sm:$0xff]
    %v26 = vld [vmem:[%s3 + $0x10] sm:$0xff]
    %v27 = vld [vmem:[%s3 + $0x18] sm:$0xff]
    %v28 = vld [vmem:[%s3 + $0x20] sm:$0xff]
    %v29 = vld [vmem:[%s3 + $0x28] sm:$0xff]
    %v30 = vld [vmem:[%s3 + $0x30] sm:$0xff]
    %v31 = vld [vmem:[%s3 + $0x38] sm:$0xff]
    %v32 = vld [vmem:[%s4] sm:$0x1]
    %v34 = vlaneseq
    %v35 = vshrl.u32 %v34, 7
    %v36 = vsub.s32 0, %v35
    %v37 = vrot.slane %v32, %v36
    %vm39 = vcmask 523264
    %v41 = vsel %vm39, %v22, 0
    %v44 = vsel %vm39, %v23, 0
    %46 = vmatprep.subr.mxu0 0.0
    %47 = vmatpush1.msra.mxu0 0.0
    %48 = vmatprep.subr.mxu0 0.0
    %49 = vmatpush1.msra.mxu0 0.0
    %50 = vmatprep.subr.mxu0 0.0
    %51 = vmatpush1.msra.mxu0 0.0
    %52 = vmatprep.subr.mxu0 0.0
    %53 = vmatpush1.msra.mxu0 0.0
    %54 = vmatprep.subr.mxu0 0.0
    %55 = vmatpush1.msra.mxu0 0.0
    %56 = vmatprep.subr.mxu0 0.0
    %57 = vmatpush1.msra.mxu0 0.0
    %58 = vmatprep.subr.mxu0 0.0
    %59 = vmatpush1.msra.mxu0 0.0
    %60 = vmatprep.subr.mxu0 0.0
    %61 = vmatpush1.msra.mxu0 0.0
    %62 = vmatprep.subr.mxu0 0.0
    %63 = vmatpush1.msra.mxu0 %v31
    %64 = vmatprep.subr.mxu0 0.0
    %65 = vmatpush1.msra.mxu0 %v30
    %66 = vmatprep.subr.mxu0 0.0
    %67 = vmatpush1.msra.mxu0 %v29
    %68 = vmatprep.subr.mxu0 0.0
    %69 = vmatpush1.msra.mxu0 %v28
    %70 = vmatprep.subr.mxu0 0.0
    %71 = vmatpush1.msra.mxu0 %v27
    %72 = vmatprep.subr.mxu0 0.0
    %73 = vmatpush1.msra.mxu0 %v26
    %74 = vmatprep.subr.mxu0 0.0
    %75 = vmatpush1.msra.mxu0 %v25
    %76 = vmatprep.subr.mxu0 0.0
    %77 = vmatpush1.msra.mxu0 %v24
    %78 = vmatprep.subr.mxu0 0.0
    %79 = vmatpush2.msra.mxu0 0.0
    %80 = vmatprep.subr.mxu0 0.0
    %81 = vmatpush2.msra.mxu0 0.0
    %82 = vmatprep.subr.mxu0 0.0
    %83 = vmatpush2.msra.mxu0 0.0
    %84 = vmatprep.subr.mxu0 0.0
    %85 = vmatpush2.msra.mxu0 0.0
    %86 = vmatprep.subr.mxu0 0.0
    %87 = vmatpush2.msra.mxu0 0.0
    %88 = vmatprep.subr.mxu0 0.0
    %89 = vmatpush2.msra.mxu0 0.0
    %90 = vmatprep.subr.mxu0 0.0
    %91 = vmatpush2.msra.mxu0 0.0
    %92 = vmatprep.subr.mxu0 0.0
    %93 = vmatpush2.msra.mxu0 0.0
    %94 = vmatprep.subr.mxu0 0.0
    %95 = vmatpush2.msra.mxu0 0.0
    %96 = vmatprep.subr.mxu0 0.0
    %97 = vmatpush2.msra.mxu0 0.0
    %98 = vmatprep.subr.mxu0 0.0
    %99 = vmatpush2.msra.mxu0 0.0
    %100 = vmatprep.subr.mxu0 0.0
    %101 = vmatpush2.msra.mxu0 0.0
    %102 = vmatprep.subr.mxu0 0.0
    %103 = vmatpush2.msra.mxu0 0.0
    %104 = vmatprep.subr.mxu0 0.0
    %105 = vmatpush2.msra.mxu0 0.0
    %106 = vmatprep.subr.mxu0 0.0
    %107 = vmatpush2.msra.mxu0 0.0
    %108 = vmatprep.subr.mxu0 0.0
    %109 = vmatpush2.msra.mxu0 0.0
    %110 = vmatprep.mubr.f32.mxu0 0.0
    %111 = vmatmul.mubr.f32.gmra.mxu0 %v41
    %v112 = vpop.f32.mrf.mxu0
    %v113 = vadd.f32 %v37, %v112
    %v114 = vpop.f32.mrf.mxu0
    %115 = vmatprep.mubr.f32.mxu0 0.0
    %116 = vmatmul.mubr.f32.gmra.mxu0 %v44
    %v117 = vpop.f32.mrf.mxu0
    %v118 = vadd.f32 %v37, %v117
    %v119 = vpop.f32.mrf.mxu0
    %120 = vdwg.mxu0
    %v121 = vld [vmem:[%s2] sm:$0xff]
    %v122 = vld [vmem:[%s2 + $0x8] sm:$0xff]
    %v123 = vmul.f32 %v113, %v121
    %v124 = vmul.f32 %v118, %v122
    %vm125 = vcmask 261120
    %v126 = vsel %vm125, %v123, 0.0
    %127 = vadd.xlane.f32.xlu0 %v126
    %v128 = vpop.xlane.xlu0 %127
    %v129 = vsel %vm125, %v124, 0.0
    %130 = vadd.xlane.f32.xlu0 %v129
    %v131 = vpop.xlane.xlu0 %130
    %v132 = vmul.f32 %v121, %v121
    %v133 = vmul.f32 %v122, %v122
    %v134 = vsel %vm125, %v132, 0.0
    %135 = vadd.xlane.f32.xlu0 %v134
    %v136 = vpop.xlane.xlu0 %135
    %v137 = vsel %vm125, %v133, 0.0
    %138 = vadd.xlane.f32.xlu0 %v137
    %v139 = vpop.xlane.xlu0 %138
    %s140 = sld [smem:[#allocation2]]
    %v141 = vstv %s140
    %v142 = vadd.f32 %v136, %v141
    %v143 = vadd.f32 %v139, %v141
    %v144 = vrcp.pop %v142
    %v145 = vrcp.pop %v143
    %v146 = vadd.f32 %v121, %v113
    %v147 = vadd.f32 %v122, %v118
    %v148 = vmul.f32 %v128, %v144
    %v149 = vmul.f32 %v131, %v145
    %v150 = vmul.f32 %v148, %v121
    %v151 = vmul.f32 %v149, %v122
    %v152 = vsub.f32 %v146, %v150
    %v153 = vsub.f32 %v147, %v151
    %154 = vst.msk [vmem:[#allocation3] sm:$0xff] %vm125, %v152
    %155 = vst.msk [vmem:[#allocation3 + $0x8] sm:$0xff] %vm125, %v153
    // Predicated region
    $region22: #{tpu_custom_call.1} parent=1 // pred_check
      _
    $region23: #{tpu_custom_call.1} parent=1 // pred_check_branch
      %157 = sbr.rel (0) target = $region25
    $region24: #{tpu_custom_call.1} parent=1 // pred_region
      %s159 = ssub.s32 256, 256
      %160 = vsyncadd [#allocation4], %s159
      %s161 = sshll.u32 [#allocation3], 4
      %s162 = int_to_ptr.vmem [resolvable:$true] %s161
      %167 = dma.vmem_to_hbm [thread:$0]  %s162, 256, %s5, [#allocation4], 128, 128, 8
    $region25: #{tpu_custom_call.1} parent=1 // pred_fallthru
      _
    // Predicated region
    $region26: #{tpu_custom_call.1} parent=1 // pred_check
      _
    $region27: #{tpu_custom_call.1} parent=1 // pred_check_branch
      %169 = sbr.rel (0) target = $region29
    $region28: #{tpu_custom_call.1} parent=1 // pred_region
      %170 = dma.done [#allocation4], 256
    $region29: #{tpu_custom_call.1} parent=1 // pred_fallthru
      _
    %171 = vsyncpa [#allocation4], 1

</llo_original>
